<compile_context>
chip_gen: v7x
topology: tpu7x:2x2x1
jax: 0.10.0
libtpu: 0.0.40
codegen_flags: <defaults>
</compile_context>

<pallas_src>
import functools
import math

import jax
import jax.numpy as jnp
from jax.experimental import pallas as pl
from jax.experimental.pallas import tpu as pltpu

MAX_LEN = 64  # matches the module's max_len default


# --------------------------------------------------------------------------
# kernels
# --------------------------------------------------------------------------
def _add_pe_kernel(x_ref, pe_ref, o_ref):
    # x_ref: (TB, S*D)   pe_ref: (1, S*D) resident   o_ref: (TB, S*D)
    o_ref[...] = x_ref[...] + pe_ref[...]


def _add_pe_dropout_kernel(x_ref, pe_ref, bits_ref, o_ref, *, threshold, scale):
    # inverted dropout: keep iff bits >= p * 2^32  (P(keep) ~= 1 - p)
    y = x_ref[...] + pe_ref[...]
    keep = bits_ref[...] >= jnp.uint32(threshold)
    o_ref[...] = jnp.where(keep, y * jnp.asarray(scale, y.dtype), jnp.zeros_like(y))


# --------------------------------------------------------------------------
# helpers
# --------------------------------------------------------------------------
def _pe_table(seq_len, d_model):
    """Sin/cos positional-encoding table, identical to the PyTorch buffer."""
    position = jnp.arange(seq_len, dtype=jnp.float32)[:, None]
    div_term = jnp.exp(
        jnp.arange(0, d_model, 2, dtype=jnp.float32) * (-math.log(10000.0) / d_model)
    )
    angles = position * div_term                       # (S, ceil(D/2))
    pe = jnp.zeros((seq_len, d_model), jnp.float32)
    pe = pe.at[:, 0::2].set(jnp.sin(angles))
    pe = pe.at[:, 1::2].set(jnp.cos(angles[:, : d_model // 2]))
    return pe


def _row_block(num_rows, row_bytes, target_bytes=4 << 20):
    """Pick a row-tile size that (a) fits a ~4 MiB VMEM budget (safe even for
    v7x's smaller scoped VMEM with double-buffering) and (b) respects the
    (8, 128) sublane constraint: either a multiple of 8 dividing num_rows, or
    the full row count."""
    cap = max(1, target_bytes // max(row_bytes, 1))
    if num_rows <= cap:
        return num_rows
    tb = (min(cap, num_rows) // 8) * 8
    while tb >= 8:
        if num_rows % tb == 0:
            return tb
        tb -= 8
    return num_rows  # fallback: single block


# --------------------------------------------------------------------------
# forward
# --------------------------------------------------------------------------
def positional_encoding_forward(x, *, dropout_p=0.1, training=False, rng_key=None):
    """x: (B, S, D). Returns x + PE[:S] (with inverted dropout if training)."""
    B, S, D = x.shape
    assert S <= MAX_LEN, "sequence length exceeds max_len"

    pe = _pe_table(S, D).astype(x.dtype)               # (S, D)
    x2 = x.reshape(B, S * D)                           # lane-dense 2D slab
    pe2 = pe.reshape(1, S * D)

    tb = _row_block(B, S * D * x.dtype.itemsize)
    grid = (pl.cdiv(B, tb),)

    row_spec = pl.BlockSpec((tb, S * D), lambda i: (i, 0))
    pe_spec = pl.BlockSpec((1, S * D), lambda i: (0, 0))   # resident in VMEM
    cparams = pltpu.CompilerParams(dimension_semantics=("parallel",))

    if training and dropout_p > 0.0:
        if rng_key is None:
            rng_key = jax.random.PRNGKey(0)
        bits = jax.random.bits(rng_key, (B, S * D), dtype=jnp.uint32)
        threshold = min(int(round(dropout_p * (2.0 ** 32))), (1 << 32) - 1)
        scale = 1.0 / (1.0 - dropout_p)
        kernel = functools.partial(
            _add_pe_dropout_kernel, threshold=threshold, scale=scale
        )
        out2 = pl.pallas_call(
            kernel,
            out_shape=jax.ShapeDtypeStruct((B, S * D), x.dtype),
            grid=grid,
            in_specs=[row_spec, pe_spec, row_spec],
            out_specs=row_spec,
            compiler_params=cparams,
        )(x2, pe2, bits)
    else:
        out2 = pl.pallas_call(
            _add_pe_kernel,
            out_shape=jax.ShapeDtypeStruct((B, S * D), x.dtype),
            grid=grid,
            in_specs=[row_spec, pe_spec],
            out_specs=row_spec,
            compiler_params=cparams,
        )(x2, pe2)

    return out2.reshape(B, S, D)


# --------------------------------------------------------------------------
# reference + test
# --------------------------------------------------------------------------
def _reference(x):
    """Pure-JAX reference of the PyTorch forward (eval mode, dropout=identity)."""
    B, S, D = x.shape
    return x + _pe_table(S, D)[None, :, :].astype(x.dtype)


if __name__ == "__main__":
    B, S, D = 2, 8, 32  # batch, seq, d_model
    key = jax.random.PRNGKey(0)
    x = jax.random.normal(key, (B, S, D), dtype=jnp.float32)

    # eval-mode forward (dropout is identity, as with nn.Dropout in .eval())
    out = positional_encoding_forward(x, dropout_p=0.1, training=False)
    out = jax.block_until_ready(out)

    ref = _reference(x)
    assert out.shape == (B, S, D)
    assert jnp.allclose(out, ref, atol=1e-5, rtol=1e-5), "mismatch vs reference"

    # training (dropout) path: values are either exactly 0 (dropped) or
    # (x + pe) * 1/(1-p) (kept).
    p = 0.1
    out_train = positional_encoding_forward(
        x, dropout_p=p, training=True, rng_key=jax.random.PRNGKey(123)
    )
    out_train = jax.block_until_ready(out_train)
    assert out_train.shape == (B, S, D)
    kept = out_train != 0
    scale = 1.0 / (1.0 - p)
    assert jnp.allclose(
        out_train[kept], (ref * scale)[kept], atol=1e-5, rtol=1e-5
    ), "training-mode kept values mismatch"

    print("KERNEL_OK")
</pallas_src>

<mosaic_0001>
module attributes {stable_mosaic.version = 11 : i64} {
  func.func @_add_pe_kernel(%arg0: i32, %arg1: memref<2x256xf32, #tpu.memory_space<vmem>>, %arg2: memref<1x256xf32, #tpu.memory_space<vmem>>, %arg3: memref<2x256xf32, #tpu.memory_space<vmem>>) attributes {dimension_semantics = [#tpu.dimension_semantics<parallel>], iteration_bounds = array<i64: 1>, scalar_prefetch = 0 : i64, scratch_operands = 0 : i64, tpu.core_type = #tpu.core_type<tc>, window_params = [{transform_indices = @transform_0, window_bounds = array<i64: 2, 256>}, {pipeline_mode = #tpu.pipeline_mode<synchronous>, transform_indices = @transform_1, window_bounds = array<i64: 1, 256>}, {transform_indices = @transform_2, window_bounds = array<i64: 2, 256>}]} {
    %c0 = arith.constant 0 : index
    %c0_0 = arith.constant 0 : index
    %0 = vector.load %arg1[%c0, %c0_0] : memref<2x256xf32, #tpu.memory_space<vmem>>, vector<2x256xf32>
    %c0_1 = arith.constant 0 : index
    %c0_2 = arith.constant 0 : index
    %1 = vector.load %arg2[%c0_1, %c0_2] : memref<1x256xf32, #tpu.memory_space<vmem>>, vector<1x256xf32>
    %2 = vector.broadcast %1 : vector<1x256xf32> to vector<2x256xf32>
    %3 = arith.addf %0, %2 : vector<2x256xf32>
    %c0_3 = arith.constant 0 : index
    %c0_4 = arith.constant 0 : index
    %4 = vector.load %arg3[%c0_3, %c0_4] : memref<2x256xf32, #tpu.memory_space<vmem>>, vector<2x256xf32>
    tpu.vector_store %arg3[%c0_3, %c0_4], %3 {strides = array<i32>} : memref<2x256xf32, #tpu.memory_space<vmem>>, vector<2x256xf32>,
    return
  }
  func.func @transform_0(%arg0: i32) -> (i32, i32) {
    %c0_i32 = arith.constant 0 : i32
    %c0_i32_0 = arith.constant 0 : i32
    return %arg0, %c0_i32 : i32, i32
  }
  func.func @transform_1(%arg0: i32) -> (i32, i32) {
    %c0_i32 = arith.constant 0 : i32
    %c0_i32_0 = arith.constant 0 : i32
    %c0_i32_1 = arith.constant 0 : i32
    return %c0_i32, %c0_i32_0 : i32, i32
  }
  func.func @transform_2(%arg0: i32) -> (i32, i32) {
    %c0_i32 = arith.constant 0 : i32
    %c0_i32_0 = arith.constant 0 : i32
    return %arg0, %c0_i32 : i32, i32
  }
}

</mosaic_0001>

<llo_original>
// kernel: tpu_custom_call.1
$region0: #{tpu_custom_call.1}
  #allocation0 [shape = 'u32[]', space=smem, size = 0x4, offset = 0x4, fixed_abs, tag = 'smem constant byte address 0x4 - core index']
  #allocation1 [shape = 'u32[144,128]{1,0:T(1,128)}', space=vmem, size = 0x12000, scoped, tag = 'internal scratch']
  %s0 = inlined_call_operand.hbm [shape: f32[2,256], index: 0, kind: input, shape index: {}]
  %s1 = inlined_call_operand.vmem [shape: f32[1,256], index: 1, kind: input, shape index: {}]
  %s2 = inlined_call_operand.hbm [shape: f32[2,256], index: 2, kind: output, shape index: {}]
  %s3 = sld [smem:[#allocation0]]
  $region22: #{tpu_custom_call.1} parent=0
    _
  %s5 = ssub.s32 1, %s3
  %s6 = scalar_select 0, %s5, %s3
  $region1: #{tpu_custom_call.1} parent=0
    #allocation2 [shape = 'u8[2048]{0}', space=vmem, size = 0x800, scoped, tag = 'input window, operand 0, single buffered']
    #allocation3 [shape = 's32[1]{0}', space=sflag, size = 0x4, scoped, tag = 'scoped memory for tpu_custom_call.1']
    #allocation4 [shape = 's32[1]{0}', space=sflag, size = 0x4, scoped, tag = 'scoped memory for tpu_custom_call.1']
    #allocation5 [shape = 'u8[2048]{0}', space=vmem, size = 0x800, scoped, tag = 'output window, operand 0, single buffered']
    %7 = vsyncpa [#allocation3], 0
    %8 = vsyncpa [#allocation4], 0
    // Predicated region
    $region2: #{tpu_custom_call.1} parent=1 // pred_check
      _
    $region3: #{tpu_custom_call.1} parent=1 // pred_check_branch
      %10 = sbr.rel (0) target = $region5
    $region4: #{tpu_custom_call.1} parent=1 // pred_region
      %s12 = ssub.s32 64, 64
      %13 = vsyncadd [#allocation3], %s12
      %s15 = sshll.u32 [#allocation2], 4
      %s16 = int_to_ptr.vmem [resolvable:$true] %s15
      %18 = dma.hbm_to_vmem [thread:$0]  %s0, 64, %s16, [#allocation3]
    $region5: #{tpu_custom_call.1} parent=1 // pred_fallthru
      _
    // Predicated region
    $region6: #{tpu_custom_call.1} parent=1 // pred_check
      _
    $region7: #{tpu_custom_call.1} parent=1 // pred_check_branch
      %20 = sbr.rel (0) target = $region9
    $region8: #{tpu_custom_call.1} parent=1 // pred_region
      _
    $region9: #{tpu_custom_call.1} parent=1 // pred_fallthru
      _
    // Predicated region
    $region10: #{tpu_custom_call.1} parent=1 // pred_check
      _
    $region11: #{tpu_custom_call.1} parent=1 // pred_check_branch
      %22 = sbr.rel (0) target = $region13
    $region12: #{tpu_custom_call.1} parent=1 // pred_region
      %23 = dma.done [#allocation3], 64
    $region13: #{tpu_custom_call.1} parent=1 // pred_fallthru
      _
    %v24 = vld [vmem:[#allocation2] sm:$0xf]
    %v25 = vld [vmem:[%s1] sm:$0x3]
    %v27 = vlaneseq
    %v28 = vshrl.u32 %v27, 7
    %v29 = vsub.s32 0, %v28
    %v30 = vrot.slane %v25, %v29
    %v31 = vlaneseq
    %v32 = vshrl.u32 %v31, 7
    %v33 = vsub.s32 1, %v32
    %v34 = vrot.slane %v25, %v33
    %v35 = vcombine.low %v30, %v34
    %v37 = vunpack.c.l.s4 1983009808
    %v38 = vunpack.c.0.s8 %v37
    %v39 = vlaneseq
    %v40 = vshrl.u32 %v39, 7
    %v41 = vsub.s32 %v38, %v40
    %v42 = vrot.slane %v35, %v41
    %v44 = vadd.f32 %v24, %v42
    %45 = vst [vmem:[#allocation5] sm:$0xf] %v44
    // Predicated region
    $region14: #{tpu_custom_call.1} parent=1 // pred_check
      _
    $region15: #{tpu_custom_call.1} parent=1 // pred_check_branch
      %47 = sbr.rel (0) target = $region17
    $region16: #{tpu_custom_call.1} parent=1 // pred_region
      %s49 = ssub.s32 64, 64
      %50 = vsyncadd [#allocation4], %s49
      %s52 = sshll.u32 [#allocation5], 4
      %s53 = int_to_ptr.vmem [resolvable:$true] %s52
      %55 = dma.vmem_to_hbm [thread:$0]  %s53, 64, %s2, [#allocation4]
    $region17: #{tpu_custom_call.1} parent=1 // pred_fallthru
      _
    // Predicated region
    $region18: #{tpu_custom_call.1} parent=1 // pred_check
      _
    $region19: #{tpu_custom_call.1} parent=1 // pred_check_branch
      %57 = sbr.rel (0) target = $region21
    $region20: #{tpu_custom_call.1} parent=1 // pred_region
      %58 = dma.done [#allocation4], 64
    $region21: #{tpu_custom_call.1} parent=1 // pred_fallthru
      _
    %59 = vsyncpa [#allocation3], 1
    %60 = vsyncpa [#allocation4], 1

</llo_original>
